<compile_context>
chip_gen: v7x
topology: tpu7x:2x2x1
jax: 0.10.0
libtpu: 0.0.40
codegen_flags: <defaults>
</compile_context>

<pallas_src>
import jax
import jax.numpy as jnp
from jax.experimental import pallas as pl
from jax.experimental.pallas import tpu as pltpu

_K_IN = 9     # fc1 input features
_K_PAD = 16   # sublane-padded contraction dim (costs nothing in tiled layout)
_N_OUT = 2    # fc2 output features
_N_PAD = 8    # sublane-padded output dim (costs nothing in tiled layout)


def _round_up(n: int, m: int) -> int:
    return ((n + m - 1) // m) * m


def _fused_affine_t_kernel(x_ref, w_ref, b_ref, o_ref):
    """o_t = W_t @ x_t + b  (lane-dense: batch on lanes, features on sublanes).

    x_ref: (16, tile_b) f32   w_ref: (8, 16) f32   b_ref: (8, 1) f32
    o_ref: (8, tile_b)  f32   — rows >= 2 are zero and sliced off in the wrapper.
    """
    o_ref[...] = (
        jnp.dot(w_ref[...], x_ref[...], preferred_element_type=jnp.float32)
        + b_ref[...]
    ).astype(o_ref.dtype)


def nn_forward(x, w1, b1, w2, b2, *, tile_b: int = 32768,
               min_pallas_batch: int = 4096):
    """Pallas implementation of NN.forward: (B, ...) with 9 features -> (B, 2)."""
    x = jnp.asarray(x, dtype=jnp.float32)          # torch.tensor(input, dtype=float)
    B = x.shape[0]
    x2d = x.reshape(B, -1)                         # output.view(output.size(0), -1)
    assert x2d.shape[1] == _K_IN, "fc1 expects 9 input features"

    w1 = jnp.asarray(w1, jnp.float32)
    b1 = jnp.asarray(b1, jnp.float32)
    w2 = jnp.asarray(w2, jnp.float32)
    b2 = jnp.asarray(b2, jnp.float32)

    # Algebraic fusion (exact up to fp32 re-association; there is no
    # nonlinearity between fc1 and fc2 in the reference module).
    w = w1 @ w2                                    # (9, 2)
    b = b1 @ w2 + b2                               # (2,)

    # Small-batch early-out: launch-overhead-bound regime; plain XLA fusion is
    # as fast or faster than a pallas_call here.
    if B < max(min_pallas_batch, 128):
        return x2d @ w + b

    # Lane-dense transposed operands.  Zero-padding 9->16 / 2->8 on the tiny
    # feature axes is free (tiled layouts pad there anyway) and keeps the MXU
    # matmul on natively aligned sublane shapes.
    x_t = jnp.pad(x2d.T, ((0, _K_PAD - _K_IN), (0, 0)))                  # (16, B)
    w_t = jnp.pad(w.T, ((0, _N_PAD - _N_OUT), (0, _K_PAD - _K_IN)))      # (8, 16)
    b_t = jnp.pad(b.reshape(_N_OUT, 1), ((0, _N_PAD - _N_OUT), (0, 0)))  # (8, 1)

    # Batch tile: a multiple of 128 lanes, capped by tile_b (double-buffered
    # VMEM use is ~192 B per batch row), and chosen so there are >= 2 grid
    # steps for v7x's two TensorCores to split under "parallel" semantics.
    tile = min(tile_b, (B // 128) * 128)
    if pl.cdiv(B, tile) < 2:
        tile = max(128, _round_up(pl.cdiv(B, 2), 128))
    num_tiles = pl.cdiv(B, tile)   # ragged tail -> masked partial final block

    out_t = pl.pallas_call(
        _fused_affine_t_kernel,
        out_shape=jax.ShapeDtypeStruct((_N_PAD, B), jnp.float32),
        grid=(num_tiles,),
        in_specs=[
            pl.BlockSpec((_K_PAD, tile), lambda i: (0, i)),    # batch tile of x_t
            pl.BlockSpec((_N_PAD, _K_PAD), lambda i: (0, 0)),  # fused weight (resident)
            pl.BlockSpec((_N_PAD, 1), lambda i: (0, 0)),       # fused bias (resident)
        ],
        out_specs=pl.BlockSpec((_N_PAD, tile), lambda i: (0, i)),
        compiler_params=pltpu.CompilerParams(
            # Independent batch tiles -> v7x can shard grid steps across its
            # two TensorCores; no effect (but harmless) on v5e/v6e.
            dimension_semantics=("parallel",),
        ),
        cost_estimate=pl.CostEstimate(
            flops=2 * _K_IN * _N_OUT * B,
            transcendentals=0,
            bytes_accessed=4 * (_K_PAD + _N_PAD) * B,
        ),
    )(x_t, w_t, b_t)

    return out_t[:_N_OUT].T                        # (B, 2)


def init_params(key):
    """nn.Linear-style init (uniform +-1/sqrt(fan_in)); weights stored (in, out)."""
    k1, k2, k3, k4 = jax.random.split(key, 4)
    bound1 = 1.0 / jnp.sqrt(9.0)
    bound2 = 1.0 / jnp.sqrt(4.0)
    w1 = jax.random.uniform(k1, (9, 4), jnp.float32, -bound1, bound1)
    b1 = jax.random.uniform(k2, (4,), jnp.float32, -bound1, bound1)
    w2 = jax.random.uniform(k3, (4, 2), jnp.float32, -bound2, bound2)
    b2 = jax.random.uniform(k4, (2,), jnp.float32, -bound2, bound2)
    return w1, b1, w2, b2


if __name__ == "__main__":
    key = jax.random.PRNGKey(0)
    pkey, xkey1, xkey2, xkey3 = jax.random.split(key, 4)
    w1, b1, w2, b2 = init_params(pkey)

    def ref_forward(xa):
        x2d = jnp.asarray(xa, jnp.float32).reshape(xa.shape[0], -1)
        return (x2d @ w1 + b1) @ w2 + b2

    # Case 1: tiny batch with a (3, 3) trailing shape -> exercises the view()
    # flatten and the small-batch XLA early-out path.
    x_small = jax.random.normal(xkey1, (8, 3, 3), dtype=jnp.float32)
    out_small = jax.block_until_ready(nn_forward(x_small, w1, b1, w2, b2))
    assert out_small.shape == (8, 2)
    assert jnp.allclose(out_small, ref_forward(x_small), atol=1e-5, rtol=1e-5)

    # Case 2: force the Pallas path at a small, non-multiple batch
    # (B=300, tile=128 -> grid=(3,), masked partial final block, no jnp.pad).
    x_multi = jax.random.normal(xkey2, (300, 9), dtype=jnp.float32)
    out_multi = jax.block_until_ready(
        nn_forward(x_multi, w1, b1, w2, b2, tile_b=128, min_pallas_batch=0))
    assert out_multi.shape == (300, 2)
    assert jnp.allclose(out_multi, ref_forward(x_multi), atol=1e-5, rtol=1e-5)

    # Case 3: default Pallas path (B=8192 -> two 4096-lane tiles, "parallel").
    x_big = jax.random.normal(xkey3, (8192, 9), dtype=jnp.float32)
    out_big = jax.block_until_ready(nn_forward(x_big, w1, b1, w2, b2))
    assert out_big.shape == (8192, 2)
    assert jnp.allclose(out_big, ref_forward(x_big), atol=1e-5, rtol=1e-5)

    print("KERNEL_OK")
</pallas_src>

<mosaic_0001>
module attributes {stable_mosaic.version = 11 : i64} {
  func.func @_fused_affine_t_kernel(%arg0: i32, %arg1: memref<16x128xf32, #tpu.memory_space<vmem>>, %arg2: memref<8x16xf32, #tpu.memory_space<vmem>>, %arg3: memref<8x1xf32, #tpu.memory_space<vmem>>, %arg4: memref<8x128xf32, #tpu.memory_space<vmem>>) attributes {dimension_semantics = [#tpu.dimension_semantics<parallel>], iteration_bounds = array<i64: 3>, scalar_prefetch = 0 : i64, scratch_operands = 0 : i64, tpu.core_type = #tpu.core_type<tc>, window_params = [{transform_indices = @transform_0, window_bounds = array<i64: 16, 128>}, {pipeline_mode = #tpu.pipeline_mode<synchronous>, transform_indices = @transform_1, window_bounds = array<i64: 8, 16>}, {pipeline_mode = #tpu.pipeline_mode<synchronous>, transform_indices = @transform_2, window_bounds = array<i64: 8, 1>}, {transform_indices = @transform_3, window_bounds = array<i64: 8, 128>}]} {
    %c0 = arith.constant 0 : index
    %c0_0 = arith.constant 0 : index
    %0 = vector.load %arg2[%c0, %c0_0] : memref<8x16xf32, #tpu.memory_space<vmem>>, vector<8x16xf32>
    %c0_1 = arith.constant 0 : index
    %c0_2 = arith.constant 0 : index
    %1 = vector.load %arg1[%c0_1, %c0_2] : memref<16x128xf32, #tpu.memory_space<vmem>>, vector<16x128xf32>
    %cst = arith.constant dense<0.000000e+00> : vector<8x128xf32>
    %2 = tpu.matmul %0, %1, %cst {dimension_numbers = #tpu.dot_dimension_numbers<[1], [0], [0], [1], [0, 0, 1, 1], [], []>} : vector<8x16xf32>, vector<16x128xf32>, vector<8x128xf32> -> vector<8x128xf32>
    %c0_3 = arith.constant 0 : index
    %c0_4 = arith.constant 0 : index
    %3 = vector.load %arg3[%c0_3, %c0_4] : memref<8x1xf32, #tpu.memory_space<vmem>>, vector<8x1xf32>
    %4 = vector.broadcast %3 : vector<8x1xf32> to vector<8x128xf32>
    %5 = arith.addf %2, %4 : vector<8x128xf32>
    %c0_5 = arith.constant 0 : index
    %c0_6 = arith.constant 0 : index
    %6 = vector.load %arg4[%c0_5, %c0_6] : memref<8x128xf32, #tpu.memory_space<vmem>>, vector<8x128xf32>
    tpu.vector_store %arg4[%c0_5, %c0_6], %5 {strides = array<i32>} : memref<8x128xf32, #tpu.memory_space<vmem>>, vector<8x128xf32>,
    return
  }
  func.func @transform_0(%arg0: i32) -> (i32, i32) {
    %c0_i32 = arith.constant 0 : i32
    %c0_i32_0 = arith.constant 0 : i32
    return %c0_i32, %arg0 : i32, i32
  }
  func.func @transform_1(%arg0: i32) -> (i32, i32) {
    %c0_i32 = arith.constant 0 : i32
    %c0_i32_0 = arith.constant 0 : i32
    %c0_i32_1 = arith.constant 0 : i32
    return %c0_i32, %c0_i32_0 : i32, i32
  }
  func.func @transform_2(%arg0: i32) -> (i32, i32) {
    %c0_i32 = arith.constant 0 : i32
    %c0_i32_0 = arith.constant 0 : i32
    %c0_i32_1 = arith.constant 0 : i32
    return %c0_i32, %c0_i32_0 : i32, i32
  }
  func.func @transform_3(%arg0: i32) -> (i32, i32) {
    %c0_i32 = arith.constant 0 : i32
    %c0_i32_0 = arith.constant 0 : i32
    return %c0_i32, %arg0 : i32, i32
  }
}

</mosaic_0001>

<llo_original>
// kernel: tpu_custom_call.1
$region0: #{tpu_custom_call.1}
  #allocation0 [shape = 'u32[]', space=smem, size = 0x4, offset = 0x4, fixed_abs, tag = 'smem constant byte address 0x4 - core index']
  #allocation1 [shape = 'u32[144,128]{1,0:T(1,128)}', space=vmem, size = 0x12000, scoped, tag = 'internal scratch']
  %s0 = inlined_call_operand.hbm [shape: f32[16,300], index: 0, kind: input, shape index: {}]
  %s1 = inlined_call_operand.vmem [shape: f32[8,16], index: 1, kind: input, shape index: {}]
  %s2 = inlined_call_operand.vmem [shape: f32[8,1], index: 2, kind: input, shape index: {}]
  %s3 = inlined_call_operand.hbm [shape: f32[8,300], index: 3, kind: output, shape index: {}]
  %s4 = sld [smem:[#allocation0]]
  $region49: #{tpu_custom_call.1} parent=0
    _
  %s6 = ssub.s32 1, %s4
  %s7 = scalar_select 0, %s6, %s4
  $region1: #{tpu_custom_call.1} parent=0
    #allocation2 [shape = 'u8[16384]{0}', space=vmem, size = 0x4000, scoped, tag = 'input window, operand 0']
    #allocation3 [shape = 's32[2]{0}', space=sflag, size = 0x8, scoped, tag = 'scoped memory for tpu_custom_call.1']
    #allocation4 [shape = 's32[2]{0}', space=sflag, size = 0x8, scoped, tag = 'scoped memory for tpu_custom_call.1']
    #allocation5 [shape = 'u8[8192]{0}', space=vmem, size = 0x2000, scoped, tag = 'output window, operand 0']
    %8 = vsyncpa [#allocation3], 0
    %s9 = scalar_lea.sflag [#allocation3], 1
    %10 = vsyncpa %s9, 0
    %11 = vsyncpa [#allocation4], 0
    %s12 = scalar_lea.sflag [#allocation4], 1
    %13 = vsyncpa %s12, 0
    loop: start=0, step=1, limit=5
    $region2: #{tpu_custom_call.1} parent=1 // loop_pre_header
      _
    $region3: #{tpu_custom_call.1} parent=1 // loop_header
      %s15 = sphi 0, %s19
      %p16 = scmp.ge.s32.totalorder %s15, 5
      %s25 = sphi 0, %s27
      %s28 = sphi 0, %s25
      %s29 = sphi 0, %s28
      %s45 = sphi 0, %s29
      %s49 = sphi 0, %s49
      %s51 = sphi 0, %s49
      %s52 = sphi 0, %s51
      %s66 = sphi 0, %s52
      %s70 = sphi 0, %s70
      %s72 = sphi 0, %s70
      %s73 = sphi 0, %s72
      %s87 = sphi 0, %s73
      %s93 = sphi 0, %s95
      %s96 = sphi 0, %s93
      %s97 = sphi 0, %s96
      %s113 = sphi 0, %s97
    $region4: #{tpu_custom_call.1} parent=1 // loop_header_branch
      %18 = sbr.rel (%p16) target = $region8
    $region5: #{tpu_custom_call.1} parent=1 // loop_body
      %s20 = ssub.s32 %s15, 1
      %s21 = ssub.s32 %s15, 2
      %s22 = sadd.s32 %s15, 1
      %s23 = ssub.s32 %s15, %s22
      %p24 = scmp.eq.s32.totalorder %s23, 0
      %s26 = sadd.s32 %s25, 1
      %s27 = scalar_select %p24, %s25, %s26
      %p30 = pneg %p24
      %p31 = scmp.eq.s32.totalorder %s15, 2
      %p32 = por %p30, %p31
      %p33 = scmp.ne.s32.totalorder %s25, %s28
      %p34 = scmp.eq.s32.totalorder %s15, 0
      %p35 = por %p33, %p34
      %p36 = scmp.ne.s32.totalorder %s25, %s28
      %p37 = scmp.eq.s32.totalorder %s20, 2
      %p38 = por %p36, %p37
      %p39 = scmp.ne.s32.totalorder %s28, %s29
      %p40 = scmp.eq.s32.totalorder %s20, 0
      %p41 = por %p39, %p40
      %p42 = scmp.ne.s32.totalorder %s28, %s29
      %p43 = scmp.eq.s32.totalorder %s21, 2
      %p44 = por %p42, %p43
      %p46 = scmp.ne.s32.totalorder %s29, %s45
      %p47 = scmp.eq.s32.totalorder %s21, 0
      %p48 = por %p46, %p47
      %s50 = sadd.s32 %s49, 1
      %p53 = scmp.eq.s32.totalorder %s15, 2
      %p54 = scmp.ne.s32.totalorder %s49, %s51
      %p55 = scmp.eq.s32.totalorder %s15, 0
      %p56 = por %p54, %p55
      %p57 = scmp.ne.s32.totalorder %s49, %s51
      %p58 = scmp.eq.s32.totalorder %s20, 2
      %p59 = por %p57, %p58
      %p60 = scmp.ne.s32.totalorder %s51, %s52
      %p61 = scmp.eq.s32.totalorder %s20, 0
      %p62 = por %p60, %p61
      %p63 = scmp.ne.s32.totalorder %s51, %s52
      %p64 = scmp.eq.s32.totalorder %s21, 2
      %p65 = por %p63, %p64
      %p67 = scmp.ne.s32.totalorder %s52, %s66
      %p68 = scmp.eq.s32.totalorder %s21, 0
      %p69 = por %p67, %p68
      %s71 = sadd.s32 %s70, 1
      %p74 = scmp.eq.s32.totalorder %s15, 2
      %p75 = scmp.ne.s32.totalorder %s70, %s72
      %p76 = scmp.eq.s32.totalorder %s15, 0
      %p77 = por %p75, %p76
      %p78 = scmp.ne.s32.totalorder %s70, %s72
      %p79 = scmp.eq.s32.totalorder %s20, 2
      %p80 = por %p78, %p79
      %p81 = scmp.ne.s32.totalorder %s72, %s73
      %p82 = scmp.eq.s32.totalorder %s20, 0
      %p83 = por %p81, %p82
      %p84 = scmp.ne.s32.totalorder %s72, %s73
      %p85 = scmp.eq.s32.totalorder %s21, 2
      %p86 = por %p84, %p85
      %p88 = scmp.ne.s32.totalorder %s73, %s87
      %p89 = scmp.eq.s32.totalorder %s21, 0
      %p90 = por %p88, %p89
      %s91 = ssub.s32 %s15, %s22
      %p92 = scmp.eq.s32.totalorder %s91, 0
      %s94 = sadd.s32 %s93, 1
      %s95 = scalar_select %p92, %s93, %s94
      %p98 = pneg %p92
      %p99 = scmp.eq.s32.totalorder %s15, 2
      %p100 = por %p98, %p99
      %p101 = scmp.ne.s32.totalorder %s93, %s96
      %p102 = scmp.eq.s32.totalorder %s15, 0
      %p103 = por %p101, %p102
      %p104 = scmp.ne.s32.totalorder %s93, %s96
      %p105 = scmp.eq.s32.totalorder %s20, 2
      %p106 = por %p104, %p105
      %p107 = scmp.ne.s32.totalorder %s96, %s97
      %p108 = scmp.eq.s32.totalorder %s20, 0
      %p109 = por %p107, %p108
      %p110 = scmp.ne.s32.totalorder %s96, %s97
      %p111 = scmp.eq.s32.totalorder %s21, 2
      %p112 = por %p110, %p111
      %p114 = scmp.ne.s32.totalorder %s97, %s113
      %p115 = scmp.eq.s32.totalorder %s21, 0
      %p116 = por %p114, %p115
      %p117 = scmp.le.s32.totalorder 1, %s15
      %p118 = scmp.lt.s32.totalorder %s15, 4
      %p119 = pnand %p117, %p118
      %p120 = pneg %p119
      // Predicated region
      $region9: #{tpu_custom_call.1} parent=5 // pred_check
        _
      $region10: #{tpu_custom_call.1} parent=5 // pred_check_branch
        %122 = sbr.rel (%p119) target = $region12
      $region11: #{tpu_custom_call.1} parent=5 // pred_region
        %s123 = ssub.s32 %s15, 1
        // Predicated region
        $region13: #{tpu_custom_call.1} parent=11 // pred_check
          %p124 = pneg %p62
        $region14: #{tpu_custom_call.1} parent=11 // pred_check_branch
          %126 = sbr.rel (%p124) target = $region16
        $region15: #{tpu_custom_call.1} parent=11 // pred_region
          _
        $region16: #{tpu_custom_call.1} parent=11 // pred_fallthru
          _
        // Predicated region
        $region17: #{tpu_custom_call.1} parent=11 // pred_check
          %p127 = pneg %p83
        $region18: #{tpu_custom_call.1} parent=11 // pred_check_branch
          %129 = sbr.rel (%p127) target = $region20
        $region19: #{tpu_custom_call.1} parent=11 // pred_region
          _
        $region20: #{tpu_custom_call.1} parent=11 // pred_fallthru
          _
      $region12: #{tpu_custom_call.1} parent=5 // pred_fallthru
        _
      %p130 = scmp.lt.s32.totalorder %s15, 3
      // Predicated region
      $region21: #{tpu_custom_call.1} parent=5 // pred_check
        %p131 = pneg %p130
      $region22: #{tpu_custom_call.1} parent=5 // pred_check_branch
        %133 = sbr.rel (%p131) target = $region24
      $region23: #{tpu_custom_call.1} parent=5 // pred_region
        // Predicated region
        $region25: #{tpu_custom_call.1} parent=23 // pred_check
          %p134 = pneg %p35
        $region26: #{tpu_custom_call.1} parent=23 // pred_check_branch
          %136 = sbr.rel (%p134) target = $region28
        $region27: #{tpu_custom_call.1} parent=23 // pred_region
          %s137 = sand.u32 %s25, 1
          %s138 = scalar_lea.sflag [#allocation3], %s137
          %s139 = sand.u32 %s25, 1
          %s140 = smul.addr %s139, 16
          %s141 = scalar_lea.vmem [#allocation2], %s140
          %s143 = ssub.s32 256, 256
          %144 = vsyncadd %s138, %s143
          %s145 = smul.addr %s15, 128
          %s146 = scalar_lea.hbm %s0, %s145
          %s147 = sshll.u32 %s141, 4
          %s148 = int_to_ptr.vmem [resolvable:$true] %s147
          %153 = dma.hbm_to_vmem [thread:$0]  %s146, 256, %s148, %s138, 384, 128, 8
        $region28: #{tpu_custom_call.1} parent=23 // pred_fallthru
          _
      $region24: #{tpu_custom_call.1} parent=5 // pred_fallthru
        _
      %p154 = scmp.le.s32.totalorder 1, %s15
      %p155 = scmp.lt.s32.totalorder %s15, 4
      %p156 = pnand %p154, %p155
      %p157 = pneg %p156
      // Predicated region
      $region29: #{tpu_custom_call.1} parent=5 // pred_check
        _
      $region30: #{tpu_custom_call.1} parent=5 // pred_check_branch
        %159 = sbr.rel (%p156) target = $region32
      $region31: #{tpu_custom_call.1} parent=5 // pred_region
        %s160 = ssub.s32 %s15, 1
        %s161 = sand.u32 %s28, 1
        %s162 = scalar_lea.sflag [#allocation3], %s161
        %s163 = sand.u32 %s28, 1
        %s164 = smul.addr %s163, 16
        %s165 = scalar_lea.vmem [#allocation2], %s164
        // Predicated region
        $region33: #{tpu_custom_call.1} parent=31 // pred_check
          %p166 = pneg %p41
        $region34: #{tpu_custom_call.1} parent=31 // pred_check_branch
          %168 = sbr.rel (%p166) target = $region36
        $region35: #{tpu_custom_call.1} parent=31 // pred_region
          %169 = dma.done %s162, 256
        $region36: #{tpu_custom_call.1} parent=31 // pred_fallthru
          _
        %s170 = sand.u32 %s28, 1
        %s171 = scalar_lea.sflag [#allocation3], %s170
        %s172 = sand.u32 %s28, 1
        %s173 = smul.addr %s172, 16
        %s174 = scalar_lea.vmem [#allocation2], %s173
        %p175 = pneg %p41
        %p176 = pneg %p38
        %p177 = pneg %p62
        %p178 = pneg %p59
        %p179 = pneg %p83
        %p180 = pneg %p80
        %p181 = pneg %p109
        %p182 = pneg %p106
        %s183 = sand.u32 %s96, 1
        %s184 = scalar_lea.sflag [#allocation4], %s183
        %s185 = sand.u32 %s96, 1
        %s186 = smul.addr %s185, 8
        %s187 = scalar_lea.vmem [#allocation5], %s186
        %v188 = vld [vmem:[%s1] sm:$0xff]
        %v189 = vld [vmem:[%s165] sm:$0xff]
        %v190 = vld [vmem:[%s165 + $0x8] sm:$0xff]
        %v191 = vld [vmem:[%s2] sm:$0xff]
        %193 = vset.pattern.permute.xlu0 0
        %194 = vperm.xlu0 %193, %v191
        %v195 = vpop.permute.xlu0 %194
        %vm197 = vcmask 130048
        %v199 = vsel %vm197, %v188, 0
        %201 = vmatprep.subr.mxu0 0.0
        %202 = vmatpush1.msra.mxu0 %v189
        %203 = vmatprep.subr.mxu0 0.0
        %204 = vmatpush1.msra.mxu0 %v190
        %205 = vmatprep.subr.mxu0 0.0
        %206 = vmatpush1.msra.mxu0 0.0
        %207 = vmatprep.subr.mxu0 0.0
        %208 = vmatpush1.msra.mxu0 0.0
        %209 = vmatprep.subr.mxu0 0.0
        %210 = vmatpush1.msra.mxu0 0.0
        %211 = vmatprep.subr.mxu0 0.0
        %212 = vmatpush1.msra.mxu0 0.0
        %213 = vmatprep.subr.mxu0 0.0
        %214 = vmatpush1.msra.mxu0 0.0
        %215 = vmatprep.subr.mxu0 0.0
        %216 = vmatpush1.msra.mxu0 0.0
        %217 = vmatprep.subr.mxu0 0.0
        %218 = vmatpush1.msra.mxu0 0.0
        %219 = vmatprep.subr.mxu0 0.0
        %220 = vmatpush1.msra.mxu0 0.0
        %221 = vmatprep.subr.mxu0 0.0
        %222 = vmatpush1.msra.mxu0 0.0
        %223 = vmatprep.subr.mxu0 0.0
        %224 = vmatpush1.msra.mxu0 0.0
        %225 = vmatprep.subr.mxu0 0.0
        %226 = vmatpush1.msra.mxu0 0.0
        %227 = vmatprep.subr.mxu0 0.0
        %228 = vmatpush1.msra.mxu0 0.0
        %229 = vmatprep.subr.mxu0 0.0
        %230 = vmatpush1.msra.mxu0 0.0
        %231 = vmatprep.subr.mxu0 0.0
        %232 = vmatpush1.msra.mxu0 0.0
        %233 = vmatprep.subr.mxu0 0.0
        %234 = vmatpush1.msra.mxu0 0.0
        %235 = vmatprep.subr.mxu0 0.0
        %236 = vmatpush1.msra.mxu0 0.0
        %237 = vmatprep.subr.mxu0 0.0
        %238 = vmatpush1.msra.mxu0 0.0
        %239 = vmatprep.subr.mxu0 0.0
        %240 = vmatpush1.msra.mxu0 0.0
        %241 = vmatprep.subr.mxu0 0.0
        %242 = vmatpush1.msra.mxu0 0.0
        %243 = vmatprep.subr.mxu0 0.0
        %244 = vmatpush1.msra.mxu0 0.0
        %245 = vmatprep.subr.mxu0 0.0
        %246 = vmatpush1.msra.mxu0 0.0
        %247 = vmatprep.subr.mxu0 0.0
        %248 = vmatpush1.msra.mxu0 0.0
        %249 = vmatprep.subr.mxu0 0.0
        %250 = vmatpush1.msra.mxu0 0.0
        %251 = vmatprep.subr.mxu0 0.0
        %252 = vmatpush1.msra.mxu0 0.0
        %253 = vmatprep.subr.mxu0 0.0
        %254 = vmatpush1.msra.mxu0 0.0
        %255 = vmatprep.subr.mxu0 0.0
        %256 = vmatpush1.msra.mxu0 0.0
        %257 = vmatprep.subr.mxu0 0.0
        %258 = vmatpush1.msra.mxu0 0.0
        %259 = vmatprep.subr.mxu0 0.0
        %260 = vmatpush1.msra.mxu0 0.0
        %261 = vmatprep.subr.mxu0 0.0
        %262 = vmatpush1.msra.mxu0 0.0
        %263 = vmatprep.subr.mxu0 0.0
        %264 = vmatpush1.msra.mxu0 0.0
        %265 = vmatprep.mubr.f32.mxu0 0.0
        %266 = vmatmul.mubr.f32.gmra.mrb[0].mxu0 %v199
        %v267 = vpop.f32.mrb[0].mxu0
        %v268 = vadd.f32 %v195, %v267
        %v269 = vpop.f32.mrb[0].mxu0
        %270 = vdwg.mxu0
        %271 = vst [vmem:[%s187] sm:$0xff] %v268
        %s272 = sand.u32 %s96, 1
        %s273 = scalar_lea.sflag [#allocation4], %s272
        %s274 = sand.u32 %s96, 1
        %s275 = smul.addr %s274, 8
        %s276 = scalar_lea.vmem [#allocation5], %s275
        // Predicated region
        $region37: #{tpu_custom_call.1} parent=31 // pred_check
          %p277 = pneg %p106
        $region38: #{tpu_custom_call.1} parent=31 // pred_check_branch
          %279 = sbr.rel (%p277) target = $region40
        $region39: #{tpu_custom_call.1} parent=31 // pred_region
          %s281 = ssub.s32 128, 128
          %282 = vsyncadd %s273, %s281
          %s283 = smul.addr %s20, 128
          %s284 = scalar_lea.hbm %s3, %s283
          %s286 = sshll.u32 %s276, 4
          %s287 = int_to_ptr.vmem [resolvable:$true] %s286
          %289 = dma.vmem_to_hbm [thread:$0]  %s287, 128, %s284, %s273
        $region40: #{tpu_custom_call.1} parent=31 // pred_fallthru
          _
      $region32: #{tpu_custom_call.1} parent=5 // pred_fallthru
        _
      %p290 = scmp.le.s32.totalorder 2, %s15
      // Predicated region
      $region41: #{tpu_custom_call.1} parent=5 // pred_check
        %p291 = pneg %p290
      $region42: #{tpu_custom_call.1} parent=5 // pred_check_branch
        %293 = sbr.rel (%p291) target = $region44
      $region43: #{tpu_custom_call.1} parent=5 // pred_region
        %s294 = ssub.s32 %s15, 2
        // Predicated region
        $region45: #{tpu_custom_call.1} parent=43 // pred_check
          %p295 = pneg %p112
        $region46: #{tpu_custom_call.1} parent=43 // pred_check_branch
          %297 = sbr.rel (%p295) target = $region48
        $region47: #{tpu_custom_call.1} parent=43 // pred_region
          %s298 = sand.u32 %s97, 1
          %s299 = scalar_lea.sflag [#allocation4], %s298
          %s300 = sand.u32 %s97, 1
          %s301 = smul.addr %s300, 8
          %s302 = scalar_lea.vmem [#allocation5], %s301
          %303 = dma.done %s299, 128
        $region48: #{tpu_custom_call.1} parent=43 // pred_fallthru
          _
      $region44: #{tpu_custom_call.1} parent=5 // pred_fallthru
        _
    $region6: #{tpu_custom_call.1} parent=1 // loop_footer
      %s19 = sadd.s32 1, %s15
    $region7: #{tpu_custom_call.1} parent=1 // loop_footer_branch
      %14 = sbr.rel target = $region3
    $region8: #{tpu_custom_call.1} parent=1 // loop_exit
      _
    %304 = vsyncpa [#allocation3], 1
    %s305 = scalar_lea.sflag [#allocation3], 1
    %306 = vsyncpa %s305, 1
    %307 = vsyncpa [#allocation4], 1
    %s308 = scalar_lea.sflag [#allocation4], 1
    %309 = vsyncpa %s308, 1

</llo_original>
